<compile_context>
chip_gen: v6e
topology: v6e:2x2x1
jax: 0.10.0
libtpu: 0.0.40
codegen_flags: <defaults>
</compile_context>

<pallas_src>
import math

import jax
import jax.numpy as jnp
from jax import lax
from jax.experimental import pallas as pl
from jax.experimental.pallas import tpu as pltpu


def head_kernel(x_ref, w_ref, o_ref):
    """Fused single-step attention head.

    x_ref: (B*T, C)  bf16  flattened activations
    w_ref: (C, 3*H)  bf16  fused [Wk | Wq | Wv] projection weight
    o_ref: (B, T, H) f32   attention output
    """
    B, T, H = o_ref.shape
    C = x_ref.shape[1]

    x = x_ref[...]
    w = w_ref[...]

    # One fused MXU projection for K, Q, V over the whole flattened batch.
    kqv = jnp.dot(x, w, preferred_element_type=jnp.float32)  # (B*T, 3H) f32

    scale = jnp.float32(C ** -0.5)
    neg_inf = jnp.float32(-jnp.inf)

    # Causal (tril) mask, shared across the batch. Diagonal is always kept,
    # so no all -inf softmax rows (no NaN risk at these shapes).
    row = lax.broadcasted_iota(jnp.int32, (T, T), 0)
    col = lax.broadcasted_iota(jnp.int32, (T, T), 1)
    causal = col <= row

    # B is tiny & static -> unrolled Python loop instead of a per-batch grid.
    for b in range(B):
        blk = kqv[b * T:(b + 1) * T, :]            # (T, 3H), static slice
        k = blk[:, 0 * H:1 * H]                    # (T, H)
        q = blk[:, 1 * H:2 * H] * scale            # fold 1/sqrt(C) into q
        v = blk[:, 2 * H:3 * H]                    # (T, H)

        # q @ k^T contracting on H directly (no explicit transpose).
        wei = lax.dot_general(q, k, (((1,), (1,)), ((), ())),
                              preferred_element_type=jnp.float32)  # (T, T)
        wei = jnp.where(causal, wei, neg_inf)

        # Numerically stable softmax in f32 on the VPU.
        wei_max = jnp.max(wei, axis=-1, keepdims=True)
        p = jnp.exp(wei - wei_max)
        denom = jnp.sum(p, axis=-1, keepdims=True)
        p = p * pl.reciprocal(denom, approx=True)  # EUP vrcp (otherwise idle)

        # dropout(p=0) is the identity.
        out = jnp.dot(p, v, preferred_element_type=jnp.float32)   # (T, H)
        o_ref[b] = out.astype(o_ref.dtype)


def head_forward(x, wk, wq, wv, *, matmul_dtype=jnp.bfloat16):
    """x: (B, T, C) f32; wk/wq/wv: (C, H) f32 -> (B, T, H) f32."""
    B, T, C = x.shape
    H = wk.shape[1]

    # Fuse the three projection weights once at wrapper level: (C, 3H).
    w_qkv = jnp.concatenate([wk, wq, wv], axis=1).astype(matmul_dtype)
    x2d = x.reshape(B * T, C).astype(matmul_dtype)

    return pl.pallas_call(
        head_kernel,
        out_shape=jax.ShapeDtypeStruct((B, T, H), jnp.float32),
        in_specs=[
            pl.BlockSpec(memory_space=pltpu.MemorySpace.VMEM),
            pl.BlockSpec(memory_space=pltpu.MemorySpace.VMEM),
        ],
        out_specs=pl.BlockSpec(memory_space=pltpu.MemorySpace.VMEM),
    )(x2d, w_qkv)


def head_reference(x, wk, wq, wv):
    """Pure-JAX f32 reference matching the PyTorch forward."""
    B, T, C = x.shape
    k = x @ wk
    q = x @ wq
    v = x @ wv
    wei = (q @ jnp.swapaxes(k, -2, -1)) * (C ** -0.5)
    tril = jnp.tril(jnp.ones((T, T), dtype=x.dtype))
    wei = jnp.where(tril == 0, -jnp.inf, wei)
    wei = jax.nn.softmax(wei, axis=-1)
    return wei @ v


if __name__ == "__main__":
    # Hyperparameters implied by the module globals
    d_model = 32        # C
    head_size = 16      # H
    block_size = 8      # max seq len; T == block_size here
    B, T = 2, block_size

    key = jax.random.PRNGKey(0)
    kx, kk, kq, kv = jax.random.split(key, 4)

    x = jax.random.normal(kx, (B, T, d_model), dtype=jnp.float32)
    # Deterministic synthetic Linear weights, stored as (d_model, head_size)
    bound = 1.0 / math.sqrt(d_model)
    wk = jax.random.uniform(kk, (d_model, head_size), jnp.float32, -bound, bound)
    wq = jax.random.uniform(kq, (d_model, head_size), jnp.float32, -bound, bound)
    wv = jax.random.uniform(kv, (d_model, head_size), jnp.float32, -bound, bound)

    out = head_forward(x, wk, wq, wv)
    out = jax.block_until_ready(out)

    ref = head_reference(x, wk, wq, wv)
    assert out.shape == (B, T, head_size)
    # bf16 matmul inputs + approx reciprocal -> relaxed tolerance vs f32 ref.
    assert jnp.allclose(out, ref, atol=3e-2, rtol=3e-2), "mismatch vs reference"

    print("KERNEL_OK")
</pallas_src>

<mosaic_0001>
module attributes {stable_mosaic.version = 11 : i64} {
  func.func @head_kernel(%arg0: memref<16x32xbf16, #tpu.memory_space<vmem>>, %arg1: memref<32x48xbf16, #tpu.memory_space<vmem>>, %arg2: memref<2x8x16xf32, #tpu.memory_space<vmem>>) attributes {dimension_semantics = [], scalar_prefetch = 0 : i64, scratch_operands = 0 : i64, tpu.core_type = #tpu.core_type<tc>} {
    %c0 = arith.constant 0 : index
    %c0_0 = arith.constant 0 : index
    %0 = vector.load %arg0[%c0, %c0_0] : memref<16x32xbf16, #tpu.memory_space<vmem>>, vector<16x32xbf16>
    %c0_1 = arith.constant 0 : index
    %c0_2 = arith.constant 0 : index
    %1 = vector.load %arg1[%c0_1, %c0_2] : memref<32x48xbf16, #tpu.memory_space<vmem>>, vector<32x48xbf16>
    %cst = arith.constant dense<0.000000e+00> : vector<16x48xf32>
    %2 = tpu.matmul %0, %1, %cst {dimension_numbers = #tpu.dot_dimension_numbers<[1], [0], [0], [1], [0, 0, 1, 1], [], []>} : vector<16x32xbf16>, vector<32x48xbf16>, vector<16x48xf32> -> vector<16x48xf32>
    %3 = tpu.iota {dimensions = array<i32: 0>} : vector<8x8xi32>
    %4 = tpu.iota {dimensions = array<i32: 1>} : vector<8x8xi32>
    %5 = arith.cmpi sle, %4, %3 : vector<8x8xi32>
    %6 = vector.extract_strided_slice %2 {offsets = [0, 0], sizes = [8, 48], strides = [1, 1]} : vector<16x48xf32> to vector<8x48xf32>
    %7 = vector.extract_strided_slice %6 {offsets = [0, 0], sizes = [8, 16], strides = [1, 1]} : vector<8x48xf32> to vector<8x16xf32>
    %8 = vector.extract_strided_slice %6 {offsets = [0, 16], sizes = [8, 16], strides = [1, 1]} : vector<8x48xf32> to vector<8x16xf32>
    %cst_3 = arith.constant 0.176776692 : f32
    %9 = vector.broadcast %cst_3 : f32 to vector<8x16xf32>
    %10 = arith.mulf %8, %9 : vector<8x16xf32>
    %11 = vector.extract_strided_slice %6 {offsets = [0, 32], sizes = [8, 16], strides = [1, 1]} : vector<8x48xf32> to vector<8x16xf32>
    %cst_4 = arith.constant dense<0.000000e+00> : vector<8x8xf32>
    %12 = tpu.matmul %10, %7, %cst_4 {dimension_numbers = #tpu.dot_dimension_numbers<[1], [1], [0], [0], [0, 0, 1, 0], [], []>} : vector<8x16xf32>, vector<8x16xf32>, vector<8x8xf32> -> vector<8x8xf32>
    %cst_5 = arith.constant 0xFF800000 : f32
    %13 = vector.broadcast %cst_5 : f32 to vector<8x8xf32>
    %14 = arith.select %5, %12, %13 : vector<8x8xi1>, vector<8x8xf32>
    %cst_6 = arith.constant dense<0xFF800000> : vector<8xf32>
    %15 = vector.multi_reduction <maximumf>, %14, %cst_6 [1] : vector<8x8xf32> to vector<8xf32>
    %16 = vector.shape_cast %15 : vector<8xf32> to vector<8x1xf32>
    %17 = vector.broadcast %16 : vector<8x1xf32> to vector<8x8xf32>
    %18 = arith.subf %14, %17 : vector<8x8xf32>
    %19 = math.exp %18 : vector<8x8xf32>
    %cst_7 = arith.constant dense<0.000000e+00> : vector<8xf32>
    %20 = vector.multi_reduction <add>, %19, %cst_7 [1] : vector<8x8xf32> to vector<8xf32>
    %21 = vector.shape_cast %20 : vector<8xf32> to vector<8x1xf32>
    %22 = tpu.reciprocal %21 {approx = true} : vector<8x1xf32> -> vector<8x1xf32>
    %23 = vector.broadcast %22 : vector<8x1xf32> to vector<8x8xf32>
    %24 = arith.mulf %19, %23 : vector<8x8xf32>
    %cst_8 = arith.constant dense<0.000000e+00> : vector<8x16xf32>
    %25 = tpu.matmul %24, %11, %cst_8 {dimension_numbers = #tpu.dot_dimension_numbers<[1], [0], [0], [1], [0, 0, 1, 1], [], []>} : vector<8x8xf32>, vector<8x16xf32>, vector<8x16xf32> -> vector<8x16xf32>
    %c0_9 = arith.constant 0 : index
    %c0_10 = arith.constant 0 : index
    %c0_11 = arith.constant 0 : index
    %26 = vector.load %arg2[%c0_9, %c0_10, %c0_11] : memref<2x8x16xf32, #tpu.memory_space<vmem>>, vector<1x8x16xf32>
    %27 = vector.shape_cast %26 : vector<1x8x16xf32> to vector<8x16xf32>
    %28 = vector.shape_cast %25 : vector<8x16xf32> to vector<1x8x16xf32>
    tpu.vector_store %arg2[%c0_9, %c0_10, %c0_11], %28 {strides = array<i32>} : memref<2x8x16xf32, #tpu.memory_space<vmem>>, vector<1x8x16xf32>,
    %29 = vector.extract_strided_slice %2 {offsets = [8, 0], sizes = [8, 48], strides = [1, 1]} : vector<16x48xf32> to vector<8x48xf32>
    %30 = vector.extract_strided_slice %29 {offsets = [0, 0], sizes = [8, 16], strides = [1, 1]} : vector<8x48xf32> to vector<8x16xf32>
    %31 = vector.extract_strided_slice %29 {offsets = [0, 16], sizes = [8, 16], strides = [1, 1]} : vector<8x48xf32> to vector<8x16xf32>
    %cst_12 = arith.constant 0.176776692 : f32
    %32 = vector.broadcast %cst_12 : f32 to vector<8x16xf32>
    %33 = arith.mulf %31, %32 : vector<8x16xf32>
    %34 = vector.extract_strided_slice %29 {offsets = [0, 32], sizes = [8, 16], strides = [1, 1]} : vector<8x48xf32> to vector<8x16xf32>
    %cst_13 = arith.constant dense<0.000000e+00> : vector<8x8xf32>
    %35 = tpu.matmul %33, %30, %cst_13 {dimension_numbers = #tpu.dot_dimension_numbers<[1], [1], [0], [0], [0, 0, 1, 0], [], []>} : vector<8x16xf32>, vector<8x16xf32>, vector<8x8xf32> -> vector<8x8xf32>
    %cst_14 = arith.constant 0xFF800000 : f32
    %36 = vector.broadcast %cst_14 : f32 to vector<8x8xf32>
    %37 = arith.select %5, %35, %36 : vector<8x8xi1>, vector<8x8xf32>
    %cst_15 = arith.constant dense<0xFF800000> : vector<8xf32>
    %38 = vector.multi_reduction <maximumf>, %37, %cst_15 [1] : vector<8x8xf32> to vector<8xf32>
    %39 = vector.shape_cast %38 : vector<8xf32> to vector<8x1xf32>
    %40 = vector.broadcast %39 : vector<8x1xf32> to vector<8x8xf32>
    %41 = arith.subf %37, %40 : vector<8x8xf32>
    %42 = math.exp %41 : vector<8x8xf32>
    %cst_16 = arith.constant dense<0.000000e+00> : vector<8xf32>
    %43 = vector.multi_reduction <add>, %42, %cst_16 [1] : vector<8x8xf32> to vector<8xf32>
    %44 = vector.shape_cast %43 : vector<8xf32> to vector<8x1xf32>
    %45 = tpu.reciprocal %44 {approx = true} : vector<8x1xf32> -> vector<8x1xf32>
    %46 = vector.broadcast %45 : vector<8x1xf32> to vector<8x8xf32>
    %47 = arith.mulf %42, %46 : vector<8x8xf32>
    %cst_17 = arith.constant dense<0.000000e+00> : vector<8x16xf32>
    %48 = tpu.matmul %47, %34, %cst_17 {dimension_numbers = #tpu.dot_dimension_numbers<[1], [0], [0], [1], [0, 0, 1, 1], [], []>} : vector<8x8xf32>, vector<8x16xf32>, vector<8x16xf32> -> vector<8x16xf32>
    %c1 = arith.constant 1 : index
    %c0_18 = arith.constant 0 : index
    %c0_19 = arith.constant 0 : index
    %49 = vector.load %arg2[%c1, %c0_18, %c0_19] : memref<2x8x16xf32, #tpu.memory_space<vmem>>, vector<1x8x16xf32>
    %50 = vector.shape_cast %49 : vector<1x8x16xf32> to vector<8x16xf32>
    %51 = vector.shape_cast %48 : vector<8x16xf32> to vector<1x8x16xf32>
    tpu.vector_store %arg2[%c1, %c0_18, %c0_19], %51 {strides = array<i32>} : memref<2x8x16xf32, #tpu.memory_space<vmem>>, vector<1x8x16xf32>,
    return
  }
}

</mosaic_0001>

<llo_original>
// kernel: tpu_custom_call.1
$region0: #{tpu_custom_call.1}
  #allocation0 [shape = 'u32[]', space=smem, size = 0x4, offset = 0x4, fixed_abs, tag = 'smem constant byte address 0x4 - core index']
  #allocation1 [shape = 'u32[144,128]{1,0:T(1,128)}', space=vmem, size = 0x12000, scoped, tag = 'internal scratch']
  %s0 = inlined_call_operand.hbm [shape: bf16[16,32], index: 0, kind: input, shape index: {}]
  %s1 = inlined_call_operand.hbm [shape: bf16[32,48], index: 1, kind: input, shape index: {}]
  %s2 = inlined_call_operand.hbm [shape: f32[2,8,16], index: 2, kind: output, shape index: {}]
  %s3 = sld [smem:[#allocation0]]
  $region26: #{tpu_custom_call.1} parent=0
    _
  %s5 = ssub.s32 1, %s3
  %s6 = scalar_select 0, %s5, %s3
  $region1: #{tpu_custom_call.1} parent=0
    #allocation2 [shape = 'u8[4096]{0}', space=vmem, size = 0x1000, scoped, tag = 'input window, operand 0, single buffered']
    #allocation3 [shape = 's32[1]{0}', space=sflag, size = 0x4, scoped, tag = 'scoped memory for tpu_custom_call.1']
    #allocation4 [shape = 's32[1]{0}', space=sflag, size = 0x4, scoped, tag = 'scoped memory for tpu_custom_call.1']
    #allocation5 [shape = 'u8[8192]{0}', space=vmem, size = 0x2000, scoped, tag = 'input window, operand 1, single buffered']
    #allocation6 [shape = 's32[1]{0}', space=sflag, size = 0x4, scoped, tag = 'scoped memory for tpu_custom_call.1']
    #allocation7 [shape = 'u8[8192]{0}', space=vmem, size = 0x2000, scoped, tag = 'output window, operand 0, single buffered']
    %7 = vsyncpa [#allocation3], 0
    %8 = vsyncpa [#allocation6], 0
    %9 = vsyncpa [#allocation4], 0
    // Predicated region
    $region2: #{tpu_custom_call.1} parent=1 // pred_check
      _
    $region3: #{tpu_custom_call.1} parent=1 // pred_check_branch
      %11 = sbr.rel (0) target = $region5
    $region4: #{tpu_custom_call.1} parent=1 // pred_region
      %s13 = ssub.s32 128, 128
      %14 = vsyncadd [#allocation3], %s13
      %s15 = sshll.u32 [#allocation2], 4
      %s16 = int_to_ptr.vmem [resolvable:$true] %s15
      %21 = dma.hbm_to_vmem [thread:$0]  %s0, 128, %s16, [#allocation3], 64, 64, 4
    $region5: #{tpu_custom_call.1} parent=1 // pred_fallthru
      _
    // Predicated region
    $region6: #{tpu_custom_call.1} parent=1 // pred_check
      _
    $region7: #{tpu_custom_call.1} parent=1 // pred_check_branch
      %23 = sbr.rel (0) target = $region9
    $region8: #{tpu_custom_call.1} parent=1 // pred_region
      %s25 = ssub.s32 256, 256
      %26 = vsyncadd [#allocation6], %s25
      %s27 = sshll.u32 [#allocation5], 4
      %s28 = int_to_ptr.vmem [resolvable:$true] %s27
      %33 = dma.hbm_to_vmem [thread:$0]  %s1, 256, %s28, [#allocation6], 64, 64, 4
    $region9: #{tpu_custom_call.1} parent=1 // pred_fallthru
      _
    // Predicated region
    $region10: #{tpu_custom_call.1} parent=1 // pred_check
      _
    $region11: #{tpu_custom_call.1} parent=1 // pred_check_branch
      %35 = sbr.rel (0) target = $region13
    $region12: #{tpu_custom_call.1} parent=1 // pred_region
      %36 = dma.done [#allocation3], 128
    $region13: #{tpu_custom_call.1} parent=1 // pred_fallthru
      _
    // Predicated region
    $region14: #{tpu_custom_call.1} parent=1 // pred_check
      _
    $region15: #{tpu_custom_call.1} parent=1 // pred_check_branch
      %38 = sbr.rel (0) target = $region17
    $region16: #{tpu_custom_call.1} parent=1 // pred_region
      %39 = dma.done [#allocation6], 256
    $region17: #{tpu_custom_call.1} parent=1 // pred_fallthru
      _
    %v41 = vld [vmem:[#allocation2] sm:$0xf]
    %v42 = vld [vmem:[#allocation2 + $0x4] sm:$0xf]
    %v43 = vld [vmem:[#allocation5] sm:$0xf]
    %v44 = vld [vmem:[#allocation5 + $0x4] sm:$0xf]
    %v45 = vld [vmem:[#allocation5 + $0x8] sm:$0xf]
    %v46 = vld [vmem:[#allocation5 + $0xc] sm:$0xf]
    %v49 = vunpack.c.l.b16 %v41
    %v50 = vunpack.c.l.b16 %v42
    %v51 = vpack.c.b16 %v50, %v49
    %v56 = vunpack.c.l.b16 %v43
    %v57 = vunpack.c.l.b16 %v44
    %v58 = vunpack.c.l.b16 %v45
    %v59 = vunpack.c.l.b16 %v46
    %v60 = vpack.c.b16 %v57, %v56
    %v61 = vpack.c.b16 %v59, %v58
    %vm64 = vcmask 261120
    %v66 = vsel %vm64, %v51, 0
    %68 = vmatprep.subr.bf16.mxu0 0
    %69 = vmatpush1.bf16.msra.mxu0 0
    %70 = vmatprep.subr.bf16.mxu0 0
    %71 = vmatpush1.bf16.msra.mxu0 0
    %72 = vmatprep.subr.bf16.mxu0 0
    %73 = vmatpush1.bf16.msra.mxu0 0
    %74 = vmatprep.subr.bf16.mxu0 0
    %75 = vmatpush1.bf16.msra.mxu0 0
    %76 = vmatprep.subr.bf16.mxu0 0
    %77 = vmatpush1.bf16.msra.mxu0 0
    %78 = vmatprep.subr.bf16.mxu0 0
    %79 = vmatpush1.bf16.msra.mxu0 0
    %80 = vmatprep.subr.bf16.mxu0 0
    %81 = vmatpush1.bf16.msra.mxu0 %v61
    %82 = vmatprep.subr.bf16.mxu0 0
    %83 = vmatpush1.bf16.msra.mxu0 %v60
    %84 = vmatprep.subr.bf16.mxu0 0
    %85 = vmatpush2.bf16.msra.mxu0 0
    %86 = vmatprep.subr.bf16.mxu0 0
    %87 = vmatpush2.bf16.msra.mxu0 0
    %88 = vmatprep.subr.bf16.mxu0 0
    %89 = vmatpush2.bf16.msra.mxu0 0
    %90 = vmatprep.subr.bf16.mxu0 0
    %91 = vmatpush2.bf16.msra.mxu0 0
    %92 = vmatprep.subr.bf16.mxu0 0
    %93 = vmatpush2.bf16.msra.mxu0 0
    %94 = vmatprep.subr.bf16.mxu0 0
    %95 = vmatpush2.bf16.msra.mxu0 0
    %96 = vmatprep.subr.bf16.mxu0 0
    %97 = vmatpush2.bf16.msra.mxu0 0
    %98 = vmatprep.subr.bf16.mxu0 0
    %99 = vmatpush2.bf16.msra.mxu0 0
    %100 = vmatprep.mubr.bf16.mxu0 0
    %101 = vmatmul.mubr.bf16.gmra.mxu0 %v66
    %v102 = vpop.f32.mrf.mxu0
    %v103 = vadd.f32 0.0, %v102
    %v104 = vpop.f32.mrf.mxu0
    %v105 = vpop.f32.mrf.mxu0
    %v106 = vadd.f32 0.0, %v105
    %v107 = vpop.f32.mrf.mxu0
    %108 = vdwg.mxu0
    %v109 = vlaneseq
    %v110 = vshrl.u32 %v109, 7
    %v111 = vlaneseq
    %v112 = vand.u32 %v111, 127
    %vm113 = vcmp.le.s32.totalorder %v112, %v110
    %v114 = vmul.f32 %v103, 0.17677669
    %116 = vrot.lane.b32.xlu0 %v114, 112
    %v117 = vpop.permute.xlu0 %116
    %vm118 = vcmask 130048
    %v119 = vsel %vm118, %v117, 0
    %v122 = vsel %vm118, %v103, 0
    %124 = vmatprep.subr.mxu0 0.0
    %125 = vmatpush1.xpose.msra.mxu0 0.0
    %126 = vmatprep.subr.mxu0 0.0
    %127 = vmatpush1.xpose.msra.mxu0 0.0
    %128 = vmatprep.subr.mxu0 0.0
    %129 = vmatpush1.xpose.msra.mxu0 0.0
    %130 = vmatprep.subr.mxu0 0.0
    %131 = vmatpush1.xpose.msra.mxu0 0.0
    %132 = vmatprep.subr.mxu0 0.0
    %133 = vmatpush1.xpose.msra.mxu0 0.0
    %134 = vmatprep.subr.mxu0 0.0
    %135 = vmatpush1.xpose.msra.mxu0 0.0
    %136 = vmatprep.subr.mxu0 0.0
    %137 = vmatpush1.xpose.msra.mxu0 0.0
    %138 = vmatprep.subr.mxu0 0.0
    %139 = vmatpush1.xpose.msra.mxu0 0.0
    %140 = vmatprep.subr.mxu0 0.0
    %141 = vmatpush1.xpose.msra.mxu0 0.0
    %142 = vmatprep.subr.mxu0 0.0
    %143 = vmatpush1.xpose.msra.mxu0 0.0
    %144 = vmatprep.subr.mxu0 0.0
    %145 = vmatpush1.xpose.msra.mxu0 0.0
    %146 = vmatprep.subr.mxu0 0.0
    %147 = vmatpush1.xpose.msra.mxu0 0.0
    %148 = vmatprep.subr.mxu0 0.0
    %149 = vmatpush1.xpose.msra.mxu0 0.0
    %150 = vmatprep.subr.mxu0 0.0
    %151 = vmatpush1.xpose.msra.mxu0 0.0
    %152 = vmatprep.subr.mxu0 0.0
    %153 = vmatpush1.xpose.msra.mxu0 0.0
    %154 = vmatprep.subr.mxu0 0.0
    %155 = vmatpush1.xpose.msra.mxu0 %v122
    %156 = vmatprep.subr.mxu0 0.0
    %157 = vmatpush2.xpose.msra.mxu0 0.0
    %158 = vmatprep.subr.mxu0 0.0
    %159 = vmatpush2.xpose.msra.mxu0 0.0
    %160 = vmatprep.subr.mxu0 0.0
    %161 = vmatpush2.xpose.msra.mxu0 0.0
    %162 = vmatprep.subr.mxu0 0.0
    %163 = vmatpush2.xpose.msra.mxu0 0.0
    %164 = vmatprep.subr.mxu0 0.0
    %165 = vmatpush2.xpose.msra.mxu0 0.0
    %166 = vmatprep.subr.mxu0 0.0
    %167 = vmatpush2.xpose.msra.mxu0 0.0
    %168 = vmatprep.subr.mxu0 0.0
    %169 = vmatpush2.xpose.msra.mxu0 0.0
    %170 = vmatprep.subr.mxu0 0.0
    %171 = vmatpush2.xpose.msra.mxu0 0.0
    %172 = vmatprep.subr.mxu0 0.0
    %173 = vmatpush2.xpose.msra.mxu0 0.0
    %174 = vmatprep.subr.mxu0 0.0
    %175 = vmatpush2.xpose.msra.mxu0 0.0
    %176 = vmatprep.subr.mxu0 0.0
    %177 = vmatpush2.xpose.msra.mxu0 0.0
    %178 = vmatprep.subr.mxu0 0.0
    %179 = vmatpush2.xpose.msra.mxu0 0.0
    %180 = vmatprep.subr.mxu0 0.0
    %181 = vmatpush2.xpose.msra.mxu0 0.0
    %182 = vmatprep.subr.mxu0 0.0
    %183 = vmatpush2.xpose.msra.mxu0 0.0
    %184 = vmatprep.subr.mxu0 0.0
    %185 = vmatpush2.xpose.msra.mxu0 0.0
    %186 = vmatprep.subr.mxu0 0.0
    %187 = vmatpush2.xpose.msra.mxu0 0.0
    %188 = vmatprep.mubr.f32.mxu0 0.0
    %189 = vmatmul.mubr.f32.gmra.mxu0 %v119
    %v190 = vpop.f32.mrf.mxu0
    %v191 = vadd.f32 0.0, %v190
    %v192 = vpop.f32.mrf.mxu0
    %193 = vdwg.mxu0
    %v194 = vsel %vm113, %v191, -inf
    %vm195 = vcmask 64512
    %v196 = vsel %vm195, %v194, -inf
    %197 = vmax.xlane.f32.xlu0 %v196
    %v198 = vpop.xlane.xlu0 %197
    %v199 = vsub.f32 %v194, %v198
    %v200 = vmul.f32 %v199, 1.442695
    %v201 = vpow.pop %v200
    %v202 = vsel %vm195, %v201, 0.0
    %203 = vadd.xlane.f32.xlu0 %v202
    %v204 = vpop.xlane.xlu0 %203
    %v205 = vrcp.pop %v204
    %v206 = vmul.f32 %v201, %v205
    %207 = vrot.lane.b32.xlu0 %v103, 96
    %v208 = vpop.permute.xlu0 %207
    %v211 = vsel %vm195, %v206, 0
    %213 = vmatprep.subr.mxu0 0.0
    %214 = vmatpush1.msra.mxu0 0.0
    %215 = vmatprep.subr.mxu0 0.0
    %216 = vmatpush1.msra.mxu0 0.0
    %217 = vmatprep.subr.mxu0 0.0
    %218 = vmatpush1.msra.mxu0 0.0
    %219 = vmatprep.subr.mxu0 0.0
    %220 = vmatpush1.msra.mxu0 0.0
    %221 = vmatprep.subr.mxu0 0.0
    %222 = vmatpush1.msra.mxu0 0.0
    %223 = vmatprep.subr.mxu0 0.0
    %224 = vmatpush1.msra.mxu0 0.0
    %225 = vmatprep.subr.mxu0 0.0
    %226 = vmatpush1.msra.mxu0 0.0
    %227 = vmatprep.subr.mxu0 0.0
    %228 = vmatpush1.msra.mxu0 0.0
    %229 = vmatprep.subr.mxu0 0.0
    %230 = vmatpush1.msra.mxu0 0.0
    %231 = vmatprep.subr.mxu0 0.0
    %232 = vmatpush1.msra.mxu0 0.0
    %233 = vmatprep.subr.mxu0 0.0
    %234 = vmatpush1.msra.mxu0 0.0
    %235 = vmatprep.subr.mxu0 0.0
    %236 = vmatpush1.msra.mxu0 0.0
    %237 = vmatprep.subr.mxu0 0.0
    %238 = vmatpush1.msra.mxu0 0.0
    %239 = vmatprep.subr.mxu0 0.0
    %240 = vmatpush1.msra.mxu0 0.0
    %241 = vmatprep.subr.mxu0 0.0
    %242 = vmatpush1.msra.mxu0 0.0
    %243 = vmatprep.subr.mxu0 0.0
    %244 = vmatpush1.msra.mxu0 %v208
    %245 = vmatprep.subr.mxu0 0.0
    %246 = vmatpush2.msra.mxu0 0.0
    %247 = vmatprep.subr.mxu0 0.0
    %248 = vmatpush2.msra.mxu0 0.0
    %249 = vmatprep.subr.mxu0 0.0
    %250 = vmatpush2.msra.mxu0 0.0
    %251 = vmatprep.subr.mxu0 0.0
    %252 = vmatpush2.msra.mxu0 0.0
    %253 = vmatprep.subr.mxu0 0.0
    %254 = vmatpush2.msra.mxu0 0.0
    %255 = vmatprep.subr.mxu0 0.0
    %256 = vmatpush2.msra.mxu0 0.0
    %257 = vmatprep.subr.mxu0 0.0
    %258 = vmatpush2.msra.mxu0 0.0
    %259 = vmatprep.subr.mxu0 0.0
    %260 = vmatpush2.msra.mxu0 0.0
    %261 = vmatprep.subr.mxu0 0.0
    %262 = vmatpush2.msra.mxu0 0.0
    %263 = vmatprep.subr.mxu0 0.0
    %264 = vmatpush2.msra.mxu0 0.0
    %265 = vmatprep.subr.mxu0 0.0
    %266 = vmatpush2.msra.mxu0 0.0
    %267 = vmatprep.subr.mxu0 0.0
    %268 = vmatpush2.msra.mxu0 0.0
    %269 = vmatprep.subr.mxu0 0.0
    %270 = vmatpush2.msra.mxu0 0.0
    %271 = vmatprep.subr.mxu0 0.0
    %272 = vmatpush2.msra.mxu0 0.0
    %273 = vmatprep.subr.mxu0 0.0
    %274 = vmatpush2.msra.mxu0 0.0
    %275 = vmatprep.subr.mxu0 0.0
    %276 = vmatpush2.msra.mxu0 0.0
    %277 = vmatprep.mubr.f32.mxu0 0.0
    %278 = vmatmul.mubr.f32.gmra.mxu0 %v211
    %v279 = vpop.f32.mrf.mxu0
    %v280 = vadd.f32 0.0, %v279
    %v281 = vpop.f32.mrf.mxu0
    %282 = vdwg.mxu0
    %283 = vst.msk [vmem:[#allocation7] sm:$0xff] %vm118, %v280
    %v284 = vmul.f32 %v106, 0.17677669
    %286 = vrot.lane.b32.xlu0 %v284, 112
    %v287 = vpop.permute.xlu0 %286
    %v288 = vsel %vm118, %v287, 0
    %v291 = vsel %vm118, %v106, 0
    %293 = vmatprep.subr.mxu0 0.0
    %294 = vmatpush1.xpose.msra.mxu0 0.0
    %295 = vmatprep.subr.mxu0 0.0
    %296 = vmatpush1.xpose.msra.mxu0 0.0
    %297 = vmatprep.subr.mxu0 0.0
    %298 = vmatpush1.xpose.msra.mxu0 0.0
    %299 = vmatprep.subr.mxu0 0.0
    %300 = vmatpush1.xpose.msra.mxu0 0.0
    %301 = vmatprep.subr.mxu0 0.0
    %302 = vmatpush1.xpose.msra.mxu0 0.0
    %303 = vmatprep.subr.mxu0 0.0
    %304 = vmatpush1.xpose.msra.mxu0 0.0
    %305 = vmatprep.subr.mxu0 0.0
    %306 = vmatpush1.xpose.msra.mxu0 0.0
    %307 = vmatprep.subr.mxu0 0.0
    %308 = vmatpush1.xpose.msra.mxu0 0.0
    %309 = vmatprep.subr.mxu0 0.0
    %310 = vmatpush1.xpose.msra.mxu0 0.0
    %311 = vmatprep.subr.mxu0 0.0
    %312 = vmatpush1.xpose.msra.mxu0 0.0
    %313 = vmatprep.subr.mxu0 0.0
    %314 = vmatpush1.xpose.msra.mxu0 0.0
    %315 = vmatprep.subr.mxu0 0.0
    %316 = vmatpush1.xpose.msra.mxu0 0.0
    %317 = vmatprep.subr.mxu0 0.0
    %318 = vmatpush1.xpose.msra.mxu0 0.0
    %319 = vmatprep.subr.mxu0 0.0
    %320 = vmatpush1.xpose.msra.mxu0 0.0
    %321 = vmatprep.subr.mxu0 0.0
    %322 = vmatpush1.xpose.msra.mxu0 0.0
    %323 = vmatprep.subr.mxu0 0.0
    %324 = vmatpush1.xpose.msra.mxu0 %v291
    %325 = vmatprep.subr.mxu0 0.0
    %326 = vmatpush2.xpose.msra.mxu0 0.0
    %327 = vmatprep.subr.mxu0 0.0
    %328 = vmatpush2.xpose.msra.mxu0 0.0
    %329 = vmatprep.subr.mxu0 0.0
    %330 = vmatpush2.xpose.msra.mxu0 0.0
    %331 = vmatprep.subr.mxu0 0.0
    %332 = vmatpush2.xpose.msra.mxu0 0.0
    %333 = vmatprep.subr.mxu0 0.0
    %334 = vmatpush2.xpose.msra.mxu0 0.0
    %335 = vmatprep.subr.mxu0 0.0
    %336 = vmatpush2.xpose.msra.mxu0 0.0
    %337 = vmatprep.subr.mxu0 0.0
    %338 = vmatpush2.xpose.msra.mxu0 0.0
    %339 = vmatprep.subr.mxu0 0.0
    %340 = vmatpush2.xpose.msra.mxu0 0.0
    %341 = vmatprep.subr.mxu0 0.0
    %342 = vmatpush2.xpose.msra.mxu0 0.0
    %343 = vmatprep.subr.mxu0 0.0
    %344 = vmatpush2.xpose.msra.mxu0 0.0
    %345 = vmatprep.subr.mxu0 0.0
    %346 = vmatpush2.xpose.msra.mxu0 0.0
    %347 = vmatprep.subr.mxu0 0.0
    %348 = vmatpush2.xpose.msra.mxu0 0.0
    %349 = vmatprep.subr.mxu0 0.0
    %350 = vmatpush2.xpose.msra.mxu0 0.0
    %351 = vmatprep.subr.mxu0 0.0
    %352 = vmatpush2.xpose.msra.mxu0 0.0
    %353 = vmatprep.subr.mxu0 0.0
    %354 = vmatpush2.xpose.msra.mxu0 0.0
    %355 = vmatprep.subr.mxu0 0.0
    %356 = vmatpush2.xpose.msra.mxu0 0.0
    %357 = vmatprep.mubr.f32.mxu0 0.0
    %358 = vmatmul.mubr.f32.gmra.mxu0 %v288
    %v359 = vpop.f32.mrf.mxu0
    %v360 = vadd.f32 0.0, %v359
    %v361 = vpop.f32.mrf.mxu0
    %362 = vdwg.mxu0
    %v363 = vsel %vm113, %v360, -inf
    %v364 = vsel %vm195, %v363, -inf
    %365 = vmax.xlane.f32.xlu0 %v364
    %v366 = vpop.xlane.xlu0 %365
    %v367 = vsub.f32 %v363, %v366
    %v368 = vmul.f32 %v367, 1.442695
    %v369 = vpow.pop %v368
    %v370 = vsel %vm195, %v369, 0.0
    %371 = vadd.xlane.f32.xlu0 %v370
    %v372 = vpop.xlane.xlu0 %371
    %v373 = vrcp.pop %v372
    %v374 = vmul.f32 %v369, %v373
    %375 = vrot.lane.b32.xlu0 %v106, 96
    %v376 = vpop.permute.xlu0 %375
    %v379 = vsel %vm195, %v374, 0
    %381 = vmatprep.subr.mxu0 0.0
    %382 = vmatpush1.msra.mxu0 0.0
    %383 = vmatprep.subr.mxu0 0.0
    %384 = vmatpush1.msra.mxu0 0.0
    %385 = vmatprep.subr.mxu0 0.0
    %386 = vmatpush1.msra.mxu0 0.0
    %387 = vmatprep.subr.mxu0 0.0
    %388 = vmatpush1.msra.mxu0 0.0
    %389 = vmatprep.subr.mxu0 0.0
    %390 = vmatpush1.msra.mxu0 0.0
    %391 = vmatprep.subr.mxu0 0.0
    %392 = vmatpush1.msra.mxu0 0.0
    %393 = vmatprep.subr.mxu0 0.0
    %394 = vmatpush1.msra.mxu0 0.0
    %395 = vmatprep.subr.mxu0 0.0
    %396 = vmatpush1.msra.mxu0 0.0
    %397 = vmatprep.subr.mxu0 0.0
    %398 = vmatpush1.msra.mxu0 0.0
    %399 = vmatprep.subr.mxu0 0.0
    %400 = vmatpush1.msra.mxu0 0.0
    %401 = vmatprep.subr.mxu0 0.0
    %402 = vmatpush1.msra.mxu0 0.0
    %403 = vmatprep.subr.mxu0 0.0
    %404 = vmatpush1.msra.mxu0 0.0
    %405 = vmatprep.subr.mxu0 0.0
    %406 = vmatpush1.msra.mxu0 0.0
    %407 = vmatprep.subr.mxu0 0.0
    %408 = vmatpush1.msra.mxu0 0.0
    %409 = vmatprep.subr.mxu0 0.0
    %410 = vmatpush1.msra.mxu0 0.0
    %411 = vmatprep.subr.mxu0 0.0
    %412 = vmatpush1.msra.mxu0 %v376
    %413 = vmatprep.subr.mxu0 0.0
    %414 = vmatpush2.msra.mxu0 0.0
    %415 = vmatprep.subr.mxu0 0.0
    %416 = vmatpush2.msra.mxu0 0.0
    %417 = vmatprep.subr.mxu0 0.0
    %418 = vmatpush2.msra.mxu0 0.0
    %419 = vmatprep.subr.mxu0 0.0
    %420 = vmatpush2.msra.mxu0 0.0
    %421 = vmatprep.subr.mxu0 0.0
    %422 = vmatpush2.msra.mxu0 0.0
    %423 = vmatprep.subr.mxu0 0.0
    %424 = vmatpush2.msra.mxu0 0.0
    %425 = vmatprep.subr.mxu0 0.0
    %426 = vmatpush2.msra.mxu0 0.0
    %427 = vmatprep.subr.mxu0 0.0
    %428 = vmatpush2.msra.mxu0 0.0
    %429 = vmatprep.subr.mxu0 0.0
    %430 = vmatpush2.msra.mxu0 0.0
    %431 = vmatprep.subr.mxu0 0.0
    %432 = vmatpush2.msra.mxu0 0.0
    %433 = vmatprep.subr.mxu0 0.0
    %434 = vmatpush2.msra.mxu0 0.0
    %435 = vmatprep.subr.mxu0 0.0
    %436 = vmatpush2.msra.mxu0 0.0
    %437 = vmatprep.subr.mxu0 0.0
    %438 = vmatpush2.msra.mxu0 0.0
    %439 = vmatprep.subr.mxu0 0.0
    %440 = vmatpush2.msra.mxu0 0.0
    %441 = vmatprep.subr.mxu0 0.0
    %442 = vmatpush2.msra.mxu0 0.0
    %443 = vmatprep.subr.mxu0 0.0
    %444 = vmatpush2.msra.mxu0 0.0
    %445 = vmatprep.mubr.f32.mxu0 0.0
    %446 = vmatmul.mubr.f32.gmra.mxu0 %v379
    %v447 = vpop.f32.mrf.mxu0
    %v448 = vadd.f32 0.0, %v447
    %v449 = vpop.f32.mrf.mxu0
    %450 = vdwg.mxu0
    %s451 = scalar_lea.vmem [#allocation7], 8
    %452 = vst.msk [vmem:[%s451] sm:$0xff] %vm118, %v448
    // Predicated region
    $region18: #{tpu_custom_call.1} parent=1 // pred_check
      _
    $region19: #{tpu_custom_call.1} parent=1 // pred_check_branch
      %454 = sbr.rel (0) target = $region21
    $region20: #{tpu_custom_call.1} parent=1 // pred_region
      %s456 = ssub.s32 256, 256
      %457 = vsyncadd [#allocation4], %s456
      %s458 = sshll.u32 [#allocation7], 4
      %s459 = int_to_ptr.vmem [resolvable:$true] %s458
      %464 = dma.vmem_to_hbm [thread:$0]  %s459, 256, %s2, [#allocation4], 128, 128, 8
    $region21: #{tpu_custom_call.1} parent=1 // pred_fallthru
      _
    // Predicated region
    $region22: #{tpu_custom_call.1} parent=1 // pred_check
      _
    $region23: #{tpu_custom_call.1} parent=1 // pred_check_branch
      %466 = sbr.rel (0) target = $region25
    $region24: #{tpu_custom_call.1} parent=1 // pred_region
      %467 = dma.done [#allocation4], 256
    $region25: #{tpu_custom_call.1} parent=1 // pred_fallthru
      _
    %468 = vsyncpa [#allocation3], 1
    %469 = vsyncpa [#allocation6], 1
    %470 = vsyncpa [#allocation4], 1

</llo_original>
